<compile_context>
chip_gen: v7x
topology: tpu7x:2x2x1
jax: 0.10.0
libtpu: 0.0.40
codegen_flags: <defaults>
</compile_context>

<pallas_src>
import jax
import jax.numpy as jnp
from jax.experimental import pallas as pl
from jax.experimental.pallas import tpu as pltpu


# ---------------------------------------------------------------------------
# Fused kernel.  Grid axis 0 = spatial tile index (reduction axis, 'arbitrary').
#   per step : backbone + neck on one (B, tile_n, C) slab, accumulate the
#              global-average-pool partial sums into a (B, F) VMEM scratch.
#   last step: apply per-repeat noise to the pooled features, run the fused
#              mean/var heads as one batched matmul, reduce across repeats
#              (mean + unbiased var) and write one lane-dense (B, 4D) output.
# ---------------------------------------------------------------------------
def _make_kernel(B, tile_n, R, D, inv_hw):
    def kernel(x_ref, wb_ref, bb_ref, wn_ref, bn_ref, noise_ref,
               wmv_ref, bmv_ref, out_ref, pooled_acc):
        t = pl.program_id(0)

        # backbone: 1x1 conv (preprocess folded into wb/bb) + ReLU
        xt = x_ref[...].reshape(B * tile_n, x_ref.shape[-1])        # (B*tile_n, C)
        f = jnp.dot(xt, wb_ref[...], preferred_element_type=jnp.float32) + bb_ref[...]
        f = jnp.maximum(f, 0.0)                                     # (B*tile_n, F)

        # neck: 1x1 conv + ReLU (per-repeat noise is spatially constant, so it
        # commutes with the linear pooling and is applied after pooling)
        g = jnp.dot(f, wn_ref[...], preferred_element_type=jnp.float32) + bn_ref[...]
        g = jnp.maximum(g, 0.0)                                     # (B*tile_n, F)

        # global-average-pool partial sums, per batch element
        part = jnp.sum(g.reshape(B, tile_n, g.shape[-1]), axis=1)   # (B, F)

        @pl.when(t == 0)
        def _():
            pooled_acc[...] = part

        @pl.when(t > 0)
        def _():
            pooled_acc[...] += part

        # finalize: heads + cross-repeat aggregation, once pooling is complete
        @pl.when(t == pl.num_programs(0) - 1)
        def _():
            pooled = pooled_acc[...] * inv_hw                       # (B, F)

            # One batched MXU matmul for all repeats: stack repeats on sublanes.
            pooled_rep = jnp.concatenate(
                [pooled * noise_ref[r] for r in range(R)], axis=0)  # (R*B, F)
            h = jnp.dot(pooled_rep, wmv_ref[...],
                        preferred_element_type=jnp.float32) + bmv_ref[...]  # (R*B, 2D)

            mvs, vvs = [], []
            for r in range(R):                                      # R is small & static
                hr = h[r * B:(r + 1) * B, :]
                mvs.append(hr[:, :D])
                vz = hr[:, D:]
                # softplus (numerically-stable form)
                vvs.append(jnp.maximum(vz, 0.0) + jnp.log1p(jnp.exp(-jnp.abs(vz))))

            inv_r = 1.0 / R
            m_mean = sum(mvs) * inv_r
            v_mean = sum(vvs) * inv_r
            ddof = 1.0 / max(R - 1, 1)                              # unbiased var (R>1)
            vom = sum((m - m_mean) ** 2 for m in mvs) * ddof
            vov = sum((v - v_mean) ** 2 for v in vvs) * ddof

            # single lane-dense store: (B, 4D) with 4D a multiple of 128 at D=32
            out_ref[...] = jnp.concatenate([m_mean, v_mean, vom, vov], axis=1)

    return kernel


def _choose_spatial_tile(hw, target_rows):
    """Largest tile <= target_rows that divides hw and is a multiple of 8."""
    target = min(target_rows, hw)
    for cand in range(target, 7, -1):
        if hw % cand == 0 and cand % 8 == 0:
            return cand
    return hw


# ---------------------------------------------------------------------------
# Wrapper = Uncertainty.forward (eval path).
# ---------------------------------------------------------------------------
def uncertainty_forward(images_nchw, params, noise, tile_rows=512):
    B, C, H, W = images_nchw.shape
    HW = H * W
    x3d = jnp.transpose(images_nchw, (0, 2, 3, 1)).reshape(B, HW, C)

    # Fold preprocess_image ((x - pixel_mean) / pixel_std) into the backbone conv.
    inv_std = 1.0 / params["pixel_std"]                                   # (1, C)
    wb_f = params["wb"] * jnp.transpose(inv_std)                          # (C, F)
    bb_f = params["bb"] - (params["pixel_mean"] * inv_std) @ params["wb"]  # (1, F)

    # Fuse mean / var heads into one matmul.
    wmv = jnp.concatenate([params["wm"], params["wv"]], axis=1)           # (F, 2D)
    bmv = jnp.concatenate([params["bm"], params["bv"]], axis=1)           # (1, 2D)

    F = params["wb"].shape[1]
    D = params["wm"].shape[1]
    R = noise.shape[0]

    tile_n = _choose_spatial_tile(HW, tile_rows)
    n_tiles = HW // tile_n

    kernel = _make_kernel(B=B, tile_n=tile_n, R=R, D=D, inv_hw=1.0 / HW)

    def _const(shape):
        nd = len(shape)
        return pl.BlockSpec(shape, lambda t, _n=nd: (0,) * _n)

    fused = pl.pallas_call(
        kernel,
        out_shape=jax.ShapeDtypeStruct((B, 4 * D), jnp.float32),
        grid_spec=pltpu.PrefetchScalarGridSpec(
            num_scalar_prefetch=0,
            grid=(n_tiles,),
            in_specs=[
                pl.BlockSpec((B, tile_n, C), lambda t: (0, t, 0)),  # image slab
                _const((C, F)), _const((1, F)),                     # backbone (folded)
                _const((F, F)), _const((1, F)),                     # neck
                _const((R, 1, F)),                                  # per-repeat noise
                _const((F, 2 * D)), _const((1, 2 * D)),             # fused heads
            ],
            out_specs=_const((B, 4 * D)),                           # lane-dense output
            scratch_shapes=[pltpu.VMEM((B, F), jnp.float32)],       # pooled accumulator
        ),
        compiler_params=pltpu.CompilerParams(
            dimension_semantics=("arbitrary",)),
    )(x3d, wb_f, bb_f, params["wn"], params["bn"], noise, wmv, bmv)

    mean_vec = fused[:, :D]
    var_vec = fused[:, D:2 * D]
    if R > 1:
        return {"mean_vector": mean_vec,
                "variance_vector": var_vec,
                "variance_of_mean_vector": fused[:, 2 * D:3 * D],
                "variance_of_variance_vector": fused[:, 3 * D:]}
    return {"mean_vector": mean_vec, "variance_vector": var_vec}


# ---------------------------------------------------------------------------
# Pure-JAX reference (faithful to the PyTorch op order: normalization first,
# noise applied in the neck *before* pooling).
# ---------------------------------------------------------------------------
def reference_forward(images_nchw, params, noise):
    B, C, H, W = images_nchw.shape
    x = (images_nchw - params["pixel_mean"].reshape(1, C, 1, 1)) \
        / params["pixel_std"].reshape(1, C, 1, 1)
    x = jnp.transpose(x, (0, 2, 3, 1)).reshape(B, H * W, C)
    f = jax.nn.relu(x @ params["wb"] + params["bb"])
    mvs, vvs = [], []
    for r in range(noise.shape[0]):
        g = jax.nn.relu(f @ params["wn"] + params["bn"]) * noise[r][None]
        pooled = g.mean(axis=1)
        mvs.append(pooled @ params["wm"] + params["bm"])
        vvs.append(jax.nn.softplus(pooled @ params["wv"] + params["bv"]))
    mv_all = jnp.stack(mvs)
    vv_all = jnp.stack(vvs)
    return {"mean_vector": jnp.mean(mv_all, axis=0),
            "variance_vector": jnp.mean(vv_all, axis=0),
            "variance_of_mean_vector": jnp.var(mv_all, axis=0, ddof=1),
            "variance_of_variance_vector": jnp.var(vv_all, axis=0, ddof=1)}


if __name__ == "__main__":
    key = jax.random.PRNGKey(0)
    B, C, H, W = 2, 4, 16, 16          # input images, NCHW
    F, D = 32, 32                      # backbone feat dim, embedding dim
    R = 2                              # parallel_dim_repeat_eval

    ks = jax.random.split(key, 10)
    params = {
        "pixel_mean": jnp.full((1, C), 0.5, jnp.float32),
        "pixel_std": jnp.full((1, C), 0.25, jnp.float32),
        "wb": 0.1 * jax.random.normal(ks[0], (C, F), jnp.float32),
        "bb": 0.01 * jax.random.normal(ks[1], (1, F), jnp.float32),
        "wn": 0.1 * jax.random.normal(ks[2], (F, F), jnp.float32),
        "bn": 0.01 * jax.random.normal(ks[3], (1, F), jnp.float32),
        "wm": 0.1 * jax.random.normal(ks[4], (F, D), jnp.float32),
        "bm": 0.01 * jax.random.normal(ks[5], (1, D), jnp.float32),
        "wv": 0.1 * jax.random.normal(ks[6], (F, D), jnp.float32),
        "bv": 0.01 * jax.random.normal(ks[7], (1, D), jnp.float32),
    }
    images = jax.random.uniform(ks[8], (B, C, H, W), jnp.float32)
    # Bayesian-neck multiplicative noise, one per parallel repeat.
    noise = 1.0 + 0.1 * jax.random.normal(ks[9], (R, 1, F), jnp.float32)

    # tile_rows=64 exercises the multi-tile pooled accumulation path (H*W=256 -> 4 tiles).
    out = uncertainty_forward(images, params, noise, tile_rows=64)
    out = jax.tree_util.tree_map(jax.block_until_ready, out)

    ref = reference_forward(images, params, noise)
    for k in ref:
        assert out[k].shape == ref[k].shape, (k, out[k].shape, ref[k].shape)
        assert jnp.allclose(out[k], ref[k], rtol=1e-4, atol=1e-5), k

    print("KERNEL_OK")
</pallas_src>

<mosaic_0001>
module attributes {stable_mosaic.version = 11 : i64} {
  func.func @kernel(%arg0: i32, %arg1: memref<2x64x4xf32, #tpu.memory_space<vmem>>, %arg2: memref<4x32xf32, #tpu.memory_space<vmem>>, %arg3: memref<1x32xf32, #tpu.memory_space<vmem>>, %arg4: memref<32x32xf32, #tpu.memory_space<vmem>>, %arg5: memref<1x32xf32, #tpu.memory_space<vmem>>, %arg6: memref<2x1x32xf32, #tpu.memory_space<vmem>>, %arg7: memref<32x64xf32, #tpu.memory_space<vmem>>, %arg8: memref<1x64xf32, #tpu.memory_space<vmem>>, %arg9: memref<2x128xf32, #tpu.memory_space<vmem>>, %arg10: memref<2x32xf32, #tpu.memory_space<vmem>>) attributes {dimension_semantics = [#tpu.dimension_semantics<arbitrary>], iteration_bounds = array<i64: 4>, scalar_prefetch = 0 : i64, scratch_operands = 1 : i64, tpu.core_type = #tpu.core_type<tc>, window_params = [{transform_indices = @transform_0, window_bounds = array<i64: 2, 64, 4>}, {pipeline_mode = #tpu.pipeline_mode<synchronous>, transform_indices = @transform_1, window_bounds = array<i64: 4, 32>}, {pipeline_mode = #tpu.pipeline_mode<synchronous>, transform_indices = @transform_2, window_bounds = array<i64: 1, 32>}, {pipeline_mode = #tpu.pipeline_mode<synchronous>, transform_indices = @transform_3, window_bounds = array<i64: 32, 32>}, {pipeline_mode = #tpu.pipeline_mode<synchronous>, transform_indices = @transform_4, window_bounds = array<i64: 1, 32>}, {pipeline_mode = #tpu.pipeline_mode<synchronous>, transform_indices = @transform_5, window_bounds = array<i64: 2, 1, 32>}, {pipeline_mode = #tpu.pipeline_mode<synchronous>, transform_indices = @transform_6, window_bounds = array<i64: 32, 64>}, {pipeline_mode = #tpu.pipeline_mode<synchronous>, transform_indices = @transform_7, window_bounds = array<i64: 1, 64>}, {pipeline_mode = #tpu.pipeline_mode<synchronous>, transform_indices = @transform_8, window_bounds = array<i64: 2, 128>}]} {
    %c0 = arith.constant 0 : index
    %c0_0 = arith.constant 0 : index
    %c0_1 = arith.constant 0 : index
    %0 = vector.load %arg1[%c0, %c0_0, %c0_1] : memref<2x64x4xf32, #tpu.memory_space<vmem>>, vector<2x64x4xf32>
    %1 = vector.shape_cast %0 : vector<2x64x4xf32> to vector<128x4xf32>
    %c0_2 = arith.constant 0 : index
    %c0_3 = arith.constant 0 : index
    %2 = vector.load %arg2[%c0_2, %c0_3] : memref<4x32xf32, #tpu.memory_space<vmem>>, vector<4x32xf32>
    %cst = arith.constant dense<0.000000e+00> : vector<128x32xf32>
    %3 = tpu.matmul %1, %2, %cst {dimension_numbers = #tpu.dot_dimension_numbers<[1], [0], [0], [1], [0, 0, 1, 1], [], []>} : vector<128x4xf32>, vector<4x32xf32>, vector<128x32xf32> -> vector<128x32xf32>
    %c0_4 = arith.constant 0 : index
    %c0_5 = arith.constant 0 : index
    %4 = vector.load %arg3[%c0_4, %c0_5] : memref<1x32xf32, #tpu.memory_space<vmem>>, vector<1x32xf32>
    %5 = vector.broadcast %4 : vector<1x32xf32> to vector<128x32xf32>
    %6 = arith.addf %3, %5 : vector<128x32xf32>
    %cst_6 = arith.constant 0.000000e+00 : f32
    %7 = vector.broadcast %cst_6 : f32 to vector<128x32xf32>
    %8 = arith.maximumf %6, %7 : vector<128x32xf32>
    %c0_7 = arith.constant 0 : index
    %c0_8 = arith.constant 0 : index
    %9 = vector.load %arg4[%c0_7, %c0_8] : memref<32x32xf32, #tpu.memory_space<vmem>>, vector<32x32xf32>
    %cst_9 = arith.constant dense<0.000000e+00> : vector<128x32xf32>
    %10 = tpu.matmul %8, %9, %cst_9 {dimension_numbers = #tpu.dot_dimension_numbers<[1], [0], [0], [1], [0, 0, 1, 1], [], []>} : vector<128x32xf32>, vector<32x32xf32>, vector<128x32xf32> -> vector<128x32xf32>
    %c0_10 = arith.constant 0 : index
    %c0_11 = arith.constant 0 : index
    %11 = vector.load %arg5[%c0_10, %c0_11] : memref<1x32xf32, #tpu.memory_space<vmem>>, vector<1x32xf32>
    %12 = vector.broadcast %11 : vector<1x32xf32> to vector<128x32xf32>
    %13 = arith.addf %10, %12 : vector<128x32xf32>
    %cst_12 = arith.constant 0.000000e+00 : f32
    %14 = vector.broadcast %cst_12 : f32 to vector<128x32xf32>
    %15 = arith.maximumf %13, %14 : vector<128x32xf32>
    %16 = vector.shape_cast %15 : vector<128x32xf32> to vector<2x64x32xf32>
    %cst_13 = arith.constant dense<0.000000e+00> : vector<2x32xf32>
    %17 = vector.multi_reduction <add>, %16, %cst_13 [1] : vector<2x64x32xf32> to vector<2x32xf32>
    %c0_i32 = arith.constant 0 : i32
    %18 = arith.cmpi eq, %arg0, %c0_i32 : i32
    %19 = arith.extui %18 : i1 to i32
    %c0_i32_14 = arith.constant 0 : i32
    %20 = arith.cmpi ne, %19, %c0_i32_14 : i32
    scf.if %20 {
      %c0_18 = arith.constant 0 : index
      %c0_19 = arith.constant 0 : index
      %27 = vector.load %arg10[%c0_18, %c0_19] : memref<2x32xf32, #tpu.memory_space<vmem>>, vector<2x32xf32>
      tpu.vector_store %arg10[%c0_18, %c0_19], %17 {strides = array<i32>} : memref<2x32xf32, #tpu.memory_space<vmem>>, vector<2x32xf32>,
    } else {
    }
    %c0_i32_15 = arith.constant 0 : i32
    %21 = arith.cmpi sgt, %arg0, %c0_i32_15 : i32
    %22 = arith.extui %21 : i1 to i32
    %c0_i32_16 = arith.constant 0 : i32
    %23 = arith.cmpi ne, %22, %c0_i32_16 : i32
    scf.if %23 {
      %c0_18 = arith.constant 0 : index
      %c0_19 = arith.constant 0 : index
      %27 = vector.load %arg10[%c0_18, %c0_19] : memref<2x32xf32, #tpu.memory_space<vmem>>, vector<2x32xf32>
      %28 = arith.addf %27, %17 : vector<2x32xf32>
      %c0_20 = arith.constant 0 : index
      %c0_21 = arith.constant 0 : index
      %29 = vector.load %arg10[%c0_20, %c0_21] : memref<2x32xf32, #tpu.memory_space<vmem>>, vector<2x32xf32>
      tpu.vector_store %arg10[%c0_20, %c0_21], %28 {strides = array<i32>} : memref<2x32xf32, #tpu.memory_space<vmem>>, vector<2x32xf32>,
    } else {
    }
    %c3_i32 = arith.constant 3 : i32
    %24 = arith.cmpi eq, %arg0, %c3_i32 : i32
    %25 = arith.extui %24 : i1 to i32
    %c0_i32_17 = arith.constant 0 : i32
    %26 = arith.cmpi ne, %25, %c0_i32_17 : i32
    scf.if %26 {
      %c0_18 = arith.constant 0 : index
      %c0_19 = arith.constant 0 : index
      %27 = vector.load %arg10[%c0_18, %c0_19] : memref<2x32xf32, #tpu.memory_space<vmem>>, vector<2x32xf32>
      %cst_20 = arith.constant 3.906250e-03 : f32
      %28 = vector.broadcast %cst_20 : f32 to vector<2x32xf32>
      %29 = arith.mulf %27, %28 : vector<2x32xf32>
      %c0_21 = arith.constant 0 : index
      %c0_22 = arith.constant 0 : index
      %c0_23 = arith.constant 0 : index
      %30 = vector.load %arg6[%c0_21, %c0_22, %c0_23] : memref<2x1x32xf32, #tpu.memory_space<vmem>>, vector<1x1x32xf32>
      %31 = vector.shape_cast %30 : vector<1x1x32xf32> to vector<1x32xf32>
      %32 = vector.broadcast %31 : vector<1x32xf32> to vector<2x32xf32>
      %33 = arith.mulf %29, %32 : vector<2x32xf32>
      %c1 = arith.constant 1 : index
      %c0_24 = arith.constant 0 : index
      %c0_25 = arith.constant 0 : index
      %34 = vector.load %arg6[%c1, %c0_24, %c0_25] : memref<2x1x32xf32, #tpu.memory_space<vmem>>, vector<1x1x32xf32>
      %35 = vector.shape_cast %34 : vector<1x1x32xf32> to vector<1x32xf32>
      %36 = vector.broadcast %35 : vector<1x32xf32> to vector<2x32xf32>
      %37 = arith.mulf %29, %36 : vector<2x32xf32>
      %38 = tpu.concatenate %33, %37 in 0 : vector<2x32xf32>, vector<2x32xf32> -> vector<4x32xf32>
      %c0_26 = arith.constant 0 : index
      %c0_27 = arith.constant 0 : index
      %39 = vector.load %arg7[%c0_26, %c0_27] : memref<32x64xf32, #tpu.memory_space<vmem>>, vector<32x64xf32>
      %cst_28 = arith.constant dense<0.000000e+00> : vector<4x64xf32>
      %40 = tpu.matmul %38, %39, %cst_28 {dimension_numbers = #tpu.dot_dimension_numbers<[1], [0], [0], [1], [0, 0, 1, 1], [], []>} : vector<4x32xf32>, vector<32x64xf32>, vector<4x64xf32> -> vector<4x64xf32>
      %c0_29 = arith.constant 0 : index
      %c0_30 = arith.constant 0 : index
      %41 = vector.load %arg8[%c0_29, %c0_30] : memref<1x64xf32, #tpu.memory_space<vmem>>, vector<1x64xf32>
      %42 = vector.broadcast %41 : vector<1x64xf32> to vector<4x64xf32>
      %43 = arith.addf %40, %42 : vector<4x64xf32>
      %44 = vector.extract_strided_slice %43 {offsets = [0, 0], sizes = [2, 64], strides = [1, 1]} : vector<4x64xf32> to vector<2x64xf32>
      %45 = vector.extract_strided_slice %44 {offsets = [0, 0], sizes = [2, 32], strides = [1, 1]} : vector<2x64xf32> to vector<2x32xf32>
      %46 = vector.extract_strided_slice %44 {offsets = [0, 32], sizes = [2, 32], strides = [1, 1]} : vector<2x64xf32> to vector<2x32xf32>
      %cst_31 = arith.constant 0.000000e+00 : f32
      %47 = vector.broadcast %cst_31 : f32 to vector<2x32xf32>
      %48 = arith.maximumf %46, %47 : vector<2x32xf32>
      %49 = math.absf %46 : vector<2x32xf32>
      %cst_32 = arith.constant 0.000000e+00 : f32
      %50 = vector.broadcast %cst_32 : f32 to vector<2x32xf32>
      %51 = arith.subf %50, %49 : vector<2x32xf32>
      %52 = math.exp %51 : vector<2x32xf32>
      %53 = math.log1p %52 : vector<2x32xf32>
      %54 = arith.addf %48, %53 : vector<2x32xf32>
      %55 = vector.extract_strided_slice %43 {offsets = [2, 0], sizes = [2, 64], strides = [1, 1]} : vector<4x64xf32> to vector<2x64xf32>
      %56 = vector.extract_strided_slice %55 {offsets = [0, 0], sizes = [2, 32], strides = [1, 1]} : vector<2x64xf32> to vector<2x32xf32>
      %57 = vector.extract_strided_slice %55 {offsets = [0, 32], sizes = [2, 32], strides = [1, 1]} : vector<2x64xf32> to vector<2x32xf32>
      %cst_33 = arith.constant 0.000000e+00 : f32
      %58 = vector.broadcast %cst_33 : f32 to vector<2x32xf32>
      %59 = arith.maximumf %57, %58 : vector<2x32xf32>
      %60 = math.absf %57 : vector<2x32xf32>
      %cst_34 = arith.constant 0.000000e+00 : f32
      %61 = vector.broadcast %cst_34 : f32 to vector<2x32xf32>
      %62 = arith.subf %61, %60 : vector<2x32xf32>
      %63 = math.exp %62 : vector<2x32xf32>
      %64 = math.log1p %63 : vector<2x32xf32>
      %65 = arith.addf %59, %64 : vector<2x32xf32>
      %cst_35 = arith.constant 0.000000e+00 : f32
      %66 = vector.broadcast %cst_35 : f32 to vector<2x32xf32>
      %67 = arith.addf %66, %45 : vector<2x32xf32>
      %68 = arith.addf %67, %56 : vector<2x32xf32>
      %cst_36 = arith.constant 5.000000e-01 : f32
      %69 = vector.broadcast %cst_36 : f32 to vector<2x32xf32>
      %70 = arith.mulf %68, %69 : vector<2x32xf32>
      %cst_37 = arith.constant 0.000000e+00 : f32
      %71 = vector.broadcast %cst_37 : f32 to vector<2x32xf32>
      %72 = arith.addf %71, %54 : vector<2x32xf32>
      %73 = arith.addf %72, %65 : vector<2x32xf32>
      %cst_38 = arith.constant 5.000000e-01 : f32
      %74 = vector.broadcast %cst_38 : f32 to vector<2x32xf32>
      %75 = arith.mulf %73, %74 : vector<2x32xf32>
      %76 = arith.subf %45, %70 : vector<2x32xf32>
      %77 = arith.mulf %76, %76 : vector<2x32xf32>
      %cst_39 = arith.constant 0.000000e+00 : f32
      %78 = vector.broadcast %cst_39 : f32 to vector<2x32xf32>
      %79 = arith.addf %78, %77 : vector<2x32xf32>
      %80 = arith.subf %56, %70 : vector<2x32xf32>
      %81 = arith.mulf %80, %80 : vector<2x32xf32>
      %82 = arith.addf %79, %81 : vector<2x32xf32>
      %cst_40 = arith.constant 1.000000e+00 : f32
      %83 = vector.broadcast %cst_40 : f32 to vector<2x32xf32>
      %84 = arith.mulf %82, %83 : vector<2x32xf32>
      %85 = arith.subf %54, %75 : vector<2x32xf32>
      %86 = arith.mulf %85, %85 : vector<2x32xf32>
      %cst_41 = arith.constant 0.000000e+00 : f32
      %87 = vector.broadcast %cst_41 : f32 to vector<2x32xf32>
      %88 = arith.addf %87, %86 : vector<2x32xf32>
      %89 = arith.subf %65, %75 : vector<2x32xf32>
      %90 = arith.mulf %89, %89 : vector<2x32xf32>
      %91 = arith.addf %88, %90 : vector<2x32xf32>
      %cst_42 = arith.constant 1.000000e+00 : f32
      %92 = vector.broadcast %cst_42 : f32 to vector<2x32xf32>
      %93 = arith.mulf %91, %92 : vector<2x32xf32>
      %94 = tpu.concatenate %70, %75, %84, %93 in 1 : vector<2x32xf32>, vector<2x32xf32>, vector<2x32xf32>, vector<2x32xf32> -> vector<2x128xf32>
      %c0_43 = arith.constant 0 : index
      %c0_44 = arith.constant 0 : index
      %95 = vector.load %arg9[%c0_43, %c0_44] : memref<2x128xf32, #tpu.memory_space<vmem>>, vector<2x128xf32>
      tpu.vector_store %arg9[%c0_43, %c0_44], %94 {strides = array<i32>} : memref<2x128xf32, #tpu.memory_space<vmem>>, vector<2x128xf32>,
    } else {
    }
    return
  }
  func.func @transform_0(%arg0: i32) -> (i32, i32, i32) {
    %c0_i32 = arith.constant 0 : i32
    %c0_i32_0 = arith.constant 0 : i32
    %c0_i32_1 = arith.constant 0 : i32
    return %c0_i32, %arg0, %c0_i32_0 : i32, i32, i32
  }
  func.func @transform_1(%arg0: i32) -> (i32, i32) {
    %c0_i32 = arith.constant 0 : i32
    %c0_i32_0 = arith.constant 0 : i32
    %c0_i32_1 = arith.constant 0 : i32
    return %c0_i32, %c0_i32_0 : i32, i32
  }
  func.func @transform_2(%arg0: i32) -> (i32, i32) {
    %c0_i32 = arith.constant 0 : i32
    %c0_i32_0 = arith.constant 0 : i32
    %c0_i32_1 = arith.constant 0 : i32
    return %c0_i32, %c0_i32_0 : i32, i32
  }
  func.func @transform_3(%arg0: i32) -> (i32, i32) {
    %c0_i32 = arith.constant 0 : i32
    %c0_i32_0 = arith.constant 0 : i32
    %c0_i32_1 = arith.constant 0 : i32
    return %c0_i32, %c0_i32_0 : i32, i32
  }
  func.func @transform_4(%arg0: i32) -> (i32, i32) {
    %c0_i32 = arith.constant 0 : i32
    %c0_i32_0 = arith.constant 0 : i32
    %c0_i32_1 = arith.constant 0 : i32
    return %c0_i32, %c0_i32_0 : i32, i32
  }
  func.func @transform_5(%arg0: i32) -> (i32, i32, i32) {
    %c0_i32 = arith.constant 0 : i32
    %c0_i32_0 = arith.constant 0 : i32
    %c0_i32_1 = arith.constant 0 : i32
    %c0_i32_2 = arith.constant 0 : i32
    return %c0_i32, %c0_i32_0, %c0_i32_1 : i32, i32, i32
  }
  func.func @transform_6(%arg0: i32) -> (i32, i32) {
    %c0_i32 = arith.constant 0 : i32
    %c0_i32_0 = arith.constant 0 : i32
    %c0_i32_1 = arith.constant 0 : i32
    return %c0_i32, %c0_i32_0 : i32, i32
  }
  func.func @transform_7(%arg0: i32) -> (i32, i32) {
    %c0_i32 = arith.constant 0 : i32
    %c0_i32_0 = arith.constant 0 : i32
    %c0_i32_1 = arith.constant 0 : i32
    return %c0_i32, %c0_i32_0 : i32, i32
  }
  func.func @transform_8(%arg0: i32) -> (i32, i32) {
    %c0_i32 = arith.constant 0 : i32
    %c0_i32_0 = arith.constant 0 : i32
    %c0_i32_1 = arith.constant 0 : i32
    return %c0_i32, %c0_i32_0 : i32, i32
  }
}

</mosaic_0001>

<llo_original>
// kernel: tpu_custom_call.1
$region0: #{tpu_custom_call.1}
  #allocation0 [shape = 'u32[]', space=smem, size = 0x4, offset = 0x4, fixed_abs, tag = 'smem constant byte address 0x4 - core index']
  #allocation1 [shape = 'u32[144,128]{1,0:T(1,128)}', space=vmem, size = 0x12000, scoped, tag = 'internal scratch']
  #allocation2 [shape = 'f32[2,32]{1,0:T(2,128)}', space=vmem, size = 0x400, scoped, tag = 'scratch operand']
  %s0 = inlined_call_operand.vmem [shape: f32[2,256,4], index: 0, kind: input, shape index: {}]
  %s1 = inlined_call_operand.vmem [shape: f32[4,32], index: 1, kind: input, shape index: {}]
  %s2 = inlined_call_operand.vmem [shape: f32[1,32], index: 2, kind: input, shape index: {}]
  %s3 = inlined_call_operand.vmem [shape: f32[32,32], index: 3, kind: input, shape index: {}]
  %s4 = inlined_call_operand.vmem [shape: f32[1,32], index: 4, kind: input, shape index: {}]
  %s5 = inlined_call_operand.vmem [shape: f32[2,1,32], index: 5, kind: input, shape index: {}]
  %s6 = inlined_call_operand.vmem [shape: f32[32,64], index: 6, kind: input, shape index: {}]
  %s7 = inlined_call_operand.vmem [shape: f32[1,64], index: 7, kind: input, shape index: {}]
  %s8 = inlined_call_operand.hbm [shape: f32[2,128], index: 8, kind: output, shape index: {}]
  %s9 = sld [smem:[#allocation0]]
  $region115: #{tpu_custom_call.1} parent=0
    _
  %s11 = ssub.s32 1, %s9
  %s12 = scalar_select 0, %s11, %s9
  $region1: #{tpu_custom_call.1} parent=0
    #allocation3 [shape = 'u8[131072]{0}', space=vmem, size = 0x20000, scoped, tag = 'input window, operand 0']
    #allocation4 [shape = 'u8[1024]{0}', space=vmem, size = 0x400, scoped, tag = 'output window, operand 0, single buffered']
    #allocation5 [shape = 's32[2]{0}', space=sflag, size = 0x8, scoped, tag = 'scoped memory for tpu_custom_call.1']
    %13 = vsyncpa [#allocation5], 0
    loop: start=0, step=1, limit=6
    $region2: #{tpu_custom_call.1} parent=1 // loop_pre_header
      _
    $region3: #{tpu_custom_call.1} parent=1 // loop_header
      %s15 = sphi 0, %s19
      %p16 = scmp.ge.s32.totalorder %s15, 6
      %s25 = sphi 0, %s27
      %s28 = sphi 0, %s25
      %s29 = sphi 0, %s28
      %s45 = sphi 0, %s29
      %s49 = sphi 0, %s49
      %s51 = sphi 0, %s49
      %s52 = sphi 0, %s51
      %s66 = sphi 0, %s52
      %s70 = sphi 0, %s70
      %s72 = sphi 0, %s70
      %s73 = sphi 0, %s72
      %s87 = sphi 0, %s73
      %s91 = sphi 0, %s91
      %s93 = sphi 0, %s91
      %s94 = sphi 0, %s93
      %s108 = sphi 0, %s94
      %s112 = sphi 0, %s112
      %s114 = sphi 0, %s112
      %s115 = sphi 0, %s114
      %s129 = sphi 0, %s115
      %s133 = sphi 0, %s133
      %s135 = sphi 0, %s133
      %s136 = sphi 0, %s135
      %s150 = sphi 0, %s136
      %s154 = sphi 0, %s154
      %s156 = sphi 0, %s154
      %s157 = sphi 0, %s156
      %s171 = sphi 0, %s157
      %s175 = sphi 0, %s175
      %s177 = sphi 0, %s175
      %s178 = sphi 0, %s177
      %s192 = sphi 0, %s178
      %s196 = sphi 0, %s196
      %s198 = sphi 0, %s196
      %s199 = sphi 0, %s198
      %s213 = sphi 0, %s199
    $region4: #{tpu_custom_call.1} parent=1 // loop_header_branch
      %18 = sbr.rel (%p16) target = $region8
    $region5: #{tpu_custom_call.1} parent=1 // loop_body
      %s20 = ssub.s32 %s15, 1
      %s21 = ssub.s32 %s15, 2
      %s22 = sadd.s32 %s15, 1
      %s23 = ssub.s32 %s15, %s22
      %p24 = scmp.eq.s32.totalorder %s23, 0
      %s26 = sadd.s32 %s25, 1
      %s27 = scalar_select %p24, %s25, %s26
      %p30 = pneg %p24
      %p31 = scmp.eq.s32.totalorder %s15, 3
      %p32 = por %p30, %p31
      %p33 = scmp.ne.s32.totalorder %s25, %s28
      %p34 = scmp.eq.s32.totalorder %s15, 0
      %p35 = por %p33, %p34
      %p36 = scmp.ne.s32.totalorder %s25, %s28
      %p37 = scmp.eq.s32.totalorder %s20, 3
      %p38 = por %p36, %p37
      %p39 = scmp.ne.s32.totalorder %s28, %s29
      %p40 = scmp.eq.s32.totalorder %s20, 0
      %p41 = por %p39, %p40
      %p42 = scmp.ne.s32.totalorder %s28, %s29
      %p43 = scmp.eq.s32.totalorder %s21, 3
      %p44 = por %p42, %p43
      %p46 = scmp.ne.s32.totalorder %s29, %s45
      %p47 = scmp.eq.s32.totalorder %s21, 0
      %p48 = por %p46, %p47
      %s50 = sadd.s32 %s49, 1
      %p53 = scmp.eq.s32.totalorder %s15, 3
      %p54 = scmp.ne.s32.totalorder %s49, %s51
      %p55 = scmp.eq.s32.totalorder %s15, 0
      %p56 = por %p54, %p55
      %p57 = scmp.ne.s32.totalorder %s49, %s51
      %p58 = scmp.eq.s32.totalorder %s20, 3
      %p59 = por %p57, %p58
      %p60 = scmp.ne.s32.totalorder %s51, %s52
      %p61 = scmp.eq.s32.totalorder %s20, 0
      %p62 = por %p60, %p61
      %p63 = scmp.ne.s32.totalorder %s51, %s52
      %p64 = scmp.eq.s32.totalorder %s21, 3
      %p65 = por %p63, %p64
      %p67 = scmp.ne.s32.totalorder %s52, %s66
      %p68 = scmp.eq.s32.totalorder %s21, 0
      %p69 = por %p67, %p68
      %s71 = sadd.s32 %s70, 1
      %p74 = scmp.eq.s32.totalorder %s15, 3
      %p75 = scmp.ne.s32.totalorder %s70, %s72
      %p76 = scmp.eq.s32.totalorder %s15, 0
      %p77 = por %p75, %p76
      %p78 = scmp.ne.s32.totalorder %s70, %s72
      %p79 = scmp.eq.s32.totalorder %s20, 3
      %p80 = por %p78, %p79
      %p81 = scmp.ne.s32.totalorder %s72, %s73
      %p82 = scmp.eq.s32.totalorder %s20, 0
      %p83 = por %p81, %p82
      %p84 = scmp.ne.s32.totalorder %s72, %s73
      %p85 = scmp.eq.s32.totalorder %s21, 3
      %p86 = por %p84, %p85
      %p88 = scmp.ne.s32.totalorder %s73, %s87
      %p89 = scmp.eq.s32.totalorder %s21, 0
      %p90 = por %p88, %p89
      %s92 = sadd.s32 %s91, 1
      %p95 = scmp.eq.s32.totalorder %s15, 3
      %p96 = scmp.ne.s32.totalorder %s91, %s93
      %p97 = scmp.eq.s32.totalorder %s15, 0
      %p98 = por %p96, %p97
      %p99 = scmp.ne.s32.totalorder %s91, %s93
      %p100 = scmp.eq.s32.totalorder %s20, 3
      %p101 = por %p99, %p100
      %p102 = scmp.ne.s32.totalorder %s93, %s94
      %p103 = scmp.eq.s32.totalorder %s20, 0
      %p104 = por %p102, %p103
      %p105 = scmp.ne.s32.totalorder %s93, %s94
      %p106 = scmp.eq.s32.totalorder %s21, 3
      %p107 = por %p105, %p106
      %p109 = scmp.ne.s32.totalorder %s94, %s108
      %p110 = scmp.eq.s32.totalorder %s21, 0
      %p111 = por %p109, %p110
      %s113 = sadd.s32 %s112, 1
      %p116 = scmp.eq.s32.totalorder %s15, 3
      %p117 = scmp.ne.s32.totalorder %s112, %s114
      %p118 = scmp.eq.s32.totalorder %s15, 0
      %p119 = por %p117, %p118
      %p120 = scmp.ne.s32.totalorder %s112, %s114
      %p121 = scmp.eq.s32.totalorder %s20, 3
      %p122 = por %p120, %p121
      %p123 = scmp.ne.s32.totalorder %s114, %s115
      %p124 = scmp.eq.s32.totalorder %s20, 0
      %p125 = por %p123, %p124
      %p126 = scmp.ne.s32.totalorder %s114, %s115
      %p127 = scmp.eq.s32.totalorder %s21, 3
      %p128 = por %p126, %p127
      %p130 = scmp.ne.s32.totalorder %s115, %s129
      %p131 = scmp.eq.s32.totalorder %s21, 0
      %p132 = por %p130, %p131
      %s134 = sadd.s32 %s133, 1
      %p137 = scmp.eq.s32.totalorder %s15, 3
      %p138 = scmp.ne.s32.totalorder %s133, %s135
      %p139 = scmp.eq.s32.totalorder %s15, 0
      %p140 = por %p138, %p139
      %p141 = scmp.ne.s32.totalorder %s133, %s135
      %p142 = scmp.eq.s32.totalorder %s20, 3
      %p143 = por %p141, %p142
      %p144 = scmp.ne.s32.totalorder %s135, %s136
      %p145 = scmp.eq.s32.totalorder %s20, 0
      %p146 = por %p144, %p145
      %p147 = scmp.ne.s32.totalorder %s135, %s136
      %p148 = scmp.eq.s32.totalorder %s21, 3
      %p149 = por %p147, %p148
      %p151 = scmp.ne.s32.totalorder %s136, %s150
      %p152 = scmp.eq.s32.totalorder %s21, 0
      %p153 = por %p151, %p152
      %s155 = sadd.s32 %s154, 1
      %p158 = scmp.eq.s32.totalorder %s15, 3
      %p159 = scmp.ne.s32.totalorder %s154, %s156
      %p160 = scmp.eq.s32.totalorder %s15, 0
      %p161 = por %p159, %p160
      %p162 = scmp.ne.s32.totalorder %s154, %s156
      %p163 = scmp.eq.s32.totalorder %s20, 3
      %p164 = por %p162, %p163
      %p165 = scmp.ne.s32.totalorder %s156, %s157
      %p166 = scmp.eq.s32.totalorder %s20, 0
      %p167 = por %p165, %p166
      %p168 = scmp.ne.s32.totalorder %s156, %s157
      %p169 = scmp.eq.s32.totalorder %s21, 3
      %p170 = por %p168, %p169
      %p172 = scmp.ne.s32.totalorder %s157, %s171
      %p173 = scmp.eq.s32.totalorder %s21, 0
      %p174 = por %p172, %p173
      %s176 = sadd.s32 %s175, 1
      %p179 = scmp.eq.s32.totalorder %s15, 3
      %p180 = scmp.ne.s32.totalorder %s175, %s177
      %p181 = scmp.eq.s32.totalorder %s15, 0
      %p182 = por %p180, %p181
      %p183 = scmp.ne.s32.totalorder %s175, %s177
      %p184 = scmp.eq.s32.totalorder %s20, 3
      %p185 = por %p183, %p184
      %p186 = scmp.ne.s32.totalorder %s177, %s178
      %p187 = scmp.eq.s32.totalorder %s20, 0
      %p188 = por %p186, %p187
      %p189 = scmp.ne.s32.totalorder %s177, %s178
      %p190 = scmp.eq.s32.totalorder %s21, 3
      %p191 = por %p189, %p190
      %p193 = scmp.ne.s32.totalorder %s178, %s192
      %p194 = scmp.eq.s32.totalorder %s21, 0
      %p195 = por %p193, %p194
      %s197 = sadd.s32 %s196, 1
      %p200 = scmp.eq.s32.totalorder %s15, 3
      %p201 = scmp.ne.s32.totalorder %s196, %s198
      %p202 = scmp.eq.s32.totalorder %s15, 0
      %p203 = por %p201, %p202
      %p204 = scmp.ne.s32.totalorder %s196, %s198
      %p205 = scmp.eq.s32.totalorder %s20, 3
      %p206 = por %p204, %p205
      %p207 = scmp.ne.s32.totalorder %s198, %s199
      %p208 = scmp.eq.s32.totalorder %s20, 0
      %p209 = por %p207, %p208
      %p210 = scmp.ne.s32.totalorder %s198, %s199
      %p211 = scmp.eq.s32.totalorder %s21, 3
      %p212 = por %p210, %p211
      %p214 = scmp.ne.s32.totalorder %s199, %s213
      %p215 = scmp.eq.s32.totalorder %s21, 0
      %p216 = por %p214, %p215
      %p217 = scmp.le.s32.totalorder 1, %s15
      %p218 = scmp.lt.s32.totalorder %s15, 5
      %p219 = pnand %p217, %p218
      %p220 = pneg %p219
      // Predicated region
      $region9: #{tpu_custom_call.1} parent=5 // pred_check
        _
      $region10: #{tpu_custom_call.1} parent=5 // pred_check_branch
        %222 = sbr.rel (%p219) target = $region12
      $region11: #{tpu_custom_call.1} parent=5 // pred_region
        %s223 = ssub.s32 %s15, 1
        // Predicated region
        $region13: #{tpu_custom_call.1} parent=11 // pred_check
          %p224 = pneg %p62
        $region14: #{tpu_custom_call.1} parent=11 // pred_check_branch
          %226 = sbr.rel (%p224) target = $region16
        $region15: #{tpu_custom_call.1} parent=11 // pred_region
          _
        $region16: #{tpu_custom_call.1} parent=11 // pred_fallthru
          _
        // Predicated region
        $region17: #{tpu_custom_call.1} parent=11 // pred_check
          %p227 = pneg %p83
        $region18: #{tpu_custom_call.1} parent=11 // pred_check_branch
          %229 = sbr.rel (%p227) target = $region20
        $region19: #{tpu_custom_call.1} parent=11 // pred_region
          _
        $region20: #{tpu_custom_call.1} parent=11 // pred_fallthru
          _
        // Predicated region
        $region21: #{tpu_custom_call.1} parent=11 // pred_check
          %p230 = pneg %p104
        $region22: #{tpu_custom_call.1} parent=11 // pred_check_branch
          %232 = sbr.rel (%p230) target = $region24
        $region23: #{tpu_custom_call.1} parent=11 // pred_region
          _
        $region24: #{tpu_custom_call.1} parent=11 // pred_fallthru
          _
        // Predicated region
        $region25: #{tpu_custom_call.1} parent=11 // pred_check
          %p233 = pneg %p125
        $region26: #{tpu_custom_call.1} parent=11 // pred_check_branch
          %235 = sbr.rel (%p233) target = $region28
        $region27: #{tpu_custom_call.1} parent=11 // pred_region
          _
        $region28: #{tpu_custom_call.1} parent=11 // pred_fallthru
          _
        // Predicated region
        $region29: #{tpu_custom_call.1} parent=11 // pred_check
          %p236 = pneg %p146
        $region30: #{tpu_custom_call.1} parent=11 // pred_check_branch
          %238 = sbr.rel (%p236) target = $region32
        $region31: #{tpu_custom_call.1} parent=11 // pred_region
          _
        $region32: #{tpu_custom_call.1} parent=11 // pred_fallthru
          _
        // Predicated region
        $region33: #{tpu_custom_call.1} parent=11 // pred_check
          %p239 = pneg %p167
        $region34: #{tpu_custom_call.1} parent=11 // pred_check_branch
          %241 = sbr.rel (%p239) target = $region36
        $region35: #{tpu_custom_call.1} parent=11 // pred_region
          _
        $region36: #{tpu_custom_call.1} parent=11 // pred_fallthru
          _
        // Predicated region
        $region37: #{tpu_custom_call.1} parent=11 // pred_check
          %p242 = pneg %p188
        $region38: #{tpu_custom_call.1} parent=11 // pred_check_branch
          %244 = sbr.rel (%p242) target = $region40
        $region39: #{tpu_custom_call.1} parent=11 // pred_region
          _
        $region40: #{tpu_custom_call.1} parent=11 // pred_fallthru
          _
      $region12: #{tpu_custom_call.1} parent=5 // pred_fallthru
        _
      %p245 = scmp.lt.s32.totalorder %s15, 4
      // Predicated region
      $region41: #{tpu_custom_call.1} parent=5 // pred_check
        %p246 = pneg %p245
      $region42: #{tpu_custom_call.1} parent=5 // pred_check_branch
        %248 = sbr.rel (%p246) target = $region44
      $region43: #{tpu_custom_call.1} parent=5 // pred_region
        // Predicated region
        $region45: #{tpu_custom_call.1} parent=43 // pred_check
          %p249 = pneg %p35
        $region46: #{tpu_custom_call.1} parent=43 // pred_check_branch
          %251 = sbr.rel (%p249) target = $region48
        $region47: #{tpu_custom_call.1} parent=43 // pred_region
          %s252 = sand.u32 %s25, 1
          %s253 = sand.u32 %s25, 1
          %s254 = smul.addr %s253, 128
          %s255 = scalar_lea.vmem [#allocation3], %s254
          %s256 = smul.u32 8, %s15
          %s257 = smul.addr %s256, 8
          %s258 = scalar_lea.vmem %s0, %s257
          // Predicated region
          $region49: #{tpu_custom_call.1} parent=47 // pred_check
            _
          $region50: #{tpu_custom_call.1} parent=47 // pred_check_branch
            %260 = sbr.rel (0) target = $region52
          $region51: #{tpu_custom_call.1} parent=47 // pred_region
            // Predicated region
            $region53: #{tpu_custom_call.1} parent=51 // pred_check
              _
            $region54: #{tpu_custom_call.1} parent=51 // pred_check_branch
              %262 = sbr.rel (0) target = $region56
            $region55: #{tpu_custom_call.1} parent=51 // pred_region
              // Predicated region
              $region68: #{tpu_custom_call.1} parent=55 // pred_check
                _
              $region69: #{tpu_custom_call.1} parent=55 // pred_check_branch
                %307 = sbr.rel (0) target = $region71
              $region70: #{tpu_custom_call.1} parent=55 // pred_region
                loop: start=0, step=1, limit=1
                $region72: #{tpu_custom_call.1} parent=70 // loop_pre_header
                  _
                $region73: #{tpu_custom_call.1} parent=70 // loop_header
                  %s309 = sphi 0, %s313
                  %p310 = scmp.ge.s32.totalorder %s309, 1
                  %s314 = sphi %s258, %s258
                  %s315 = sphi %s255, %s255
                $region74: #{tpu_custom_call.1} parent=70 // loop_header_branch
                  %312 = sbr.rel (%p310) target = $region78
                $region75: #{tpu_custom_call.1} parent=70 // loop_body
                  %v316 = vld [vmem:[%s314] sm:$0xff]
                  %317 = vst [vmem:[%s315] sm:$0xff] %v316
                  %v318 = vld [vmem:[%s314 + $0x8] sm:$0xff]
                  %319 = vst [vmem:[%s315 + $0x8] sm:$0xff] %v318
                  %v320 = vld [vmem:[%s314 + $0x10] sm:$0xff]
                  %321 = vst [vmem:[%s315 + $0x10] sm:$0xff] %v320
                  %v322 = vld [vmem:[%s314 + $0x18] sm:$0xff]
                  %323 = vst [vmem:[%s315 + $0x18] sm:$0xff] %v322
                  %v324 = vld [vmem:[%s314 + $0x20] sm:$0xff]
                  %325 = vst [vmem:[%s315 + $0x20] sm:$0xff] %v324
                  %v326 = vld [vmem:[%s314 + $0x28] sm:$0xff]
                  %327 = vst [vmem:[%s315 + $0x28] sm:$0xff] %v326
                  %v328 = vld [vmem:[%s314 + $0x30] sm:$0xff]
                  %329 = vst [vmem:[%s315 + $0x30] sm:$0xff] %v328
                  %v330 = vld [vmem:[%s314 + $0x38] sm:$0xff]
                  %331 = vst [vmem:[%s315 + $0x38] sm:$0xff] %v330
                  %v332 = vld [vmem:[%s314 + $0x100] sm:$0xff]
                  %333 = vst [vmem:[%s315 + $0x40] sm:$0xff] %v332
                  %v334 = vld [vmem:[%s314 + $0x108] sm:$0xff]
                  %335 = vst [vmem:[%s315 + $0x48] sm:$0xff] %v334
                  %v336 = vld [vmem:[%s314 + $0x110] sm:$0xff]
                  %337 = vst [vmem:[%s315 + $0x50] sm:$0xff] %v336
                  %v338 = vld [vmem:[%s314 + $0x118] sm:$0xff]
                  %339 = vst [vmem:[%s315 + $0x58] sm:$0xff] %v338
                  %v340 = vld [vmem:[%s314 + $0x120] sm:$0xff]
                  %341 = vst [vmem:[%s315 + $0x60] sm:$0xff] %v340
                  %v342 = vld [vmem:[%s314 + $0x128] sm:$0xff]
                  %343 = vst [vmem:[%s315 + $0x68] sm:$0xff] %v342
                  %v344 = vld [vmem:[%s314 + $0x130] sm:$0xff]
                  %345 = vst [vmem:[%s315 + $0x70] sm:$0xff] %v344
                  %v346 = vld [vmem:[%s314 + $0x138] sm:$0xff]
                  %347 = vst [vmem:[%s315 + $0x78] sm:$0xff] %v346
                $region76: #{tpu_custom_call.1} parent=70 // loop_footer
                  %s313 = sadd.s32 1, %s309
                $region77: #{tpu_custom_call.1} parent=70 // loop_footer_branch
                  %308 = sbr.rel target = $region73
                $region78: #{tpu_custom_call.1} parent=70 // loop_exit
                  _
              $region71: #{tpu_custom_call.1} parent=55 // pred_fallthru
                _
              // Predicated region
              $region79: #{tpu_custom_call.1} parent=55 // pred_check
                _
              $region80: #{tpu_custom_call.1} parent=55 // pred_check_branch
                %349 = sbr.rel target = $region82
              $region81: #{tpu_custom_call.1} parent=55 // pred_region
                _
              $region82: #{tpu_custom_call.1} parent=55 // pred_fallthru
                _
            $region56: #{tpu_custom_call.1} parent=51 // pred_fallthru
              _
            // Predicated region
            $region57: #{tpu_custom_call.1} parent=51 // pred_check
              _
            $region58: #{tpu_custom_call.1} parent=51 // pred_check_branch
              %264 = sbr.rel target = $region60
            $region59: #{tpu_custom_call.1} parent=51 // pred_region
              loop: start=0, step=1, limit=1
              $region61: #{tpu_custom_call.1} parent=59 // loop_pre_header
                _
              $region62: #{tpu_custom_call.1} parent=59 // loop_header
                %s267 = sphi 0, %s271
                %p268 = scmp.ge.s32.totalorder %s267, 1
                %s272 = sphi %s258, %s258
                %s273 = sphi %s255, %s255
              $region63: #{tpu_custom_call.1} parent=59 // loop_header_branch
                %270 = sbr.rel (%p268) target = $region67
              $region64: #{tpu_custom_call.1} parent=59 // loop_body
                %v274 = vld [vmem:[%s272] sm:$0xff]
                %275 = vst [vmem:[%s273] sm:$0xff] %v274
                %v276 = vld [vmem:[%s272 + $0x8] sm:$0xff]
                %277 = vst [vmem:[%s273 + $0x8] sm:$0xff] %v276
                %v278 = vld [vmem:[%s272 + $0x10] sm:$0xff]
                %279 = vst [vmem:[%s273 + $0x10] sm:$0xff] %v278
                %v280 = vld [vmem:[%s272 + $0x18] sm:$0xff]
                %281 = vst [vmem:[%s273 + $0x18] sm:$0xff] %v280
                %v282 = vld [vmem:[%s272 + $0x20] sm:$0xff]
                %283 = vst [vmem:[%s273 + $0x20] sm:$0xff] %v282
                %v284 = vld [vmem:[%s272 + $0x28] sm:$0xff]
                %285 = vst [vmem:[%s273 + $0x28] sm:$0xff] %v284
                %v286 = vld [vmem:[%s272 + $0x30] sm:$0xff]
                %287 = vst [vmem:[%s273 + $0x30] sm:$0xff] %v286
                %v288 = vld [vmem:[%s272 + $0x38] sm:$0xff]
                %289 = vst [vmem:[%s273 + $0x38] sm:$0xff] %v288
                %v290 = vld [vmem:[%s272 + $0x100] sm:$0xff]
                %291 = vst [vmem:[%s273 + $0x40] sm:$0xff] %v290
                %v292 = vld [vmem:[%s272 + $0x108] sm:$0xff]
                %293 = vst [vmem:[%s273 + $0x48] sm:$0xff] %v292
                %v294 = vld [vmem:[%s272 + $0x110] sm:$0xff]
                %295 = vst [vmem:[%s273 + $0x50] sm:$0xff] %v294
                %v296 = vld [vmem:[%s272 + $0x118] sm:$0xff]
                %297 = vst [vmem:[%s273 + $0x58] sm:$0xff] %v296
                %v298 = vld [vmem:[%s272 + $0x120] sm:$0xff]
                %299 = vst [vmem:[%s273 + $0x60] sm:$0xff] %v298
                %v300 = vld [vmem:[%s272 + $0x128] sm:$0xff]
                %301 = vst [vmem:[%s273 + $0x68] sm:$0xff] %v300
                %v302 = vld [vmem:[%s272 + $0x130] sm:$0xff]
                %303 = vst [vmem:[%s273 + $0x70] sm:$0xff] %v302
                %v304 = vld [vmem:[%s272 + $0x138] sm:$0xff]
                %305 = vst [vmem:[%s273 + $0x78] sm:$0xff] %v304
              $region65: #{tpu_custom_call.1} parent=59 // loop_footer
                %s271 = sadd.s32 1, %s267
              $region66: #{tpu_custom_call.1} parent=59 // loop_footer_branch
                %266 = sbr.rel target = $region62
              $region67: #{tpu_custom_call.1} parent=59 // loop_exit
                _
            $region60: #{tpu_custom_call.1} parent=51 // pred_fallthru
              _
          $region52: #{tpu_custom_call.1} parent=47 // pred_fallthru
            _
          %350 = vnop
        $region48: #{tpu_custom_call.1} parent=43 // pred_fallthru
          _
      $region44: #{tpu_custom_call.1} parent=5 // pred_fallthru
        _
      %p351 = scmp.le.s32.totalorder 1, %s15
      %p352 = scmp.lt.s32.totalorder %s15, 5
      %p353 = pnand %p351, %p352
      %p354 = pneg %p353
      // Predicated region
      $region83: #{tpu_custom_call.1} parent=5 // pred_check
        _
      $region84: #{tpu_custom_call.1} parent=5 // pred_check_branch
        %356 = sbr.rel (%p353) target = $region86
      $region85: #{tpu_custom_call.1} parent=5 // pred_region
        %s357 = ssub.s32 %s15, 1
        %s358 = sand.u32 %s28, 1
        %s359 = sand.u32 %s28, 1
        %s360 = smul.addr %s359, 128
        %s361 = scalar_lea.vmem [#allocation3], %s360
        // Predicated region
        $region87: #{tpu_custom_call.1} parent=85 // pred_check
          %p362 = pneg %p41
        $region88: #{tpu_custom_call.1} parent=85 // pred_check_branch
          %364 = sbr.rel (%p362) target = $region90
        $region89: #{tpu_custom_call.1} parent=85 // pred_region
          _
        $region90: #{tpu_custom_call.1} parent=85 // pred_fallthru
          _
        %s365 = sand.u32 %s28, 1
        %s366 = sand.u32 %s28, 1
        %s367 = smul.addr %s366, 128
        %s368 = scalar_lea.vmem [#allocation3], %s367
        %p369 = pneg %p41
        %p370 = pneg %p38
        %p371 = pneg %p62
        %p372 = pneg %p59
        %p373 = pneg %p83
        %p374 = pneg %p80
        %p375 = pneg %p104
        %p376 = pneg %p101
        %p377 = pneg %p125
        %p378 = pneg %p122
        %p379 = pneg %p146
        %p380 = pneg %p143
        %p381 = pneg %p167
        %p382 = pneg %p164
        %p383 = pneg %p188
        %p384 = pneg %p185
        %p385 = pneg %p209
        %p386 = pneg %p206
        %s387 = smul.u32 8, %s20
        %v388 = vld [vmem:[%s361] sm:$0xff]
        %v389 = vld [vmem:[%s361 + $0x8] sm:$0xff]
        %v390 = vld [vmem:[%s361 + $0x10] sm:$0xff]
        %v391 = vld [vmem:[%s361 + $0x18] sm:$0xff]
        %v392 = vld [vmem:[%s361 + $0x20] sm:$0xff]
        %v393 = vld [vmem:[%s361 + $0x28] sm:$0xff]
        %v394 = vld [vmem:[%s361 + $0x30] sm:$0xff]
        %v395 = vld [vmem:[%s361 + $0x38] sm:$0xff]
        %v396 = vld [vmem:[%s361 + $0x40] sm:$0xff]
        %v397 = vld [vmem:[%s361 + $0x48] sm:$0xff]
        %v398 = vld [vmem:[%s361 + $0x50] sm:$0xff]
        %v399 = vld [vmem:[%s361 + $0x58] sm:$0xff]
        %v400 = vld [vmem:[%s361 + $0x60] sm:$0xff]
        %v401 = vld [vmem:[%s361 + $0x68] sm:$0xff]
        %v402 = vld [vmem:[%s361 + $0x70] sm:$0xff]
        %v403 = vld [vmem:[%s361 + $0x78] sm:$0xff]
        %v404 = vld [vmem:[%s1] sm:$0xf]
        %v405 = vld [vmem:[%s2] sm:$0x1]
        %v407 = vlaneseq
        %v408 = vshrl.u32 %v407, 7
        %v409 = vsub.s32 0, %v408
        %v410 = vrot.slane %v405, %v409
        %vm412 = vcmask 31744
        %v414 = vsel %vm412, %v388, 0
        %v417 = vsel %vm412, %v389, 0
        %v420 = vsel %vm412, %v390, 0
        %v423 = vsel %vm412, %v391, 0
        %v426 = vsel %vm412, %v392, 0
        %v429 = vsel %vm412, %v393, 0
        %v432 = vsel %vm412, %v394, 0
        %v435 = vsel %vm412, %v395, 0
        %v438 = vsel %vm412, %v396, 0
        %v441 = vsel %vm412, %v397, 0
        %v444 = vsel %vm412, %v398, 0
        %v447 = vsel %vm412, %v399, 0
        %v450 = vsel %vm412, %v400, 0
        %v453 = vsel %vm412, %v401, 0
        %v456 = vsel %vm412, %v402, 0
        %v459 = vsel %vm412, %v403, 0
        %vm461 = vcmask 1043456
        %v463 = vsel %vm461, %v404, 0
        %465 = vmatprep.subr.mxu0 0.0
        %466 = vmatpush1.msra.mxu0 %v463
        %467 = vmatprep.subr.mxu0 0.0
        %468 = vmatpush1.msra.mxu0 0.0
        %469 = vmatprep.subr.mxu0 0.0
        %470 = vmatpush1.msra.mxu0 0.0
        %471 = vmatprep.subr.mxu0 0.0
        %472 = vmatpush1.msra.mxu0 0.0
        %473 = vmatprep.subr.mxu0 0.0
        %474 = vmatpush1.msra.mxu0 0.0
        %475 = vmatprep.subr.mxu0 0.0
        %476 = vmatpush1.msra.mxu0 0.0
        %477 = vmatprep.subr.mxu0 0.0
        %478 = vmatpush1.msra.mxu0 0.0
        %479 = vmatprep.subr.mxu0 0.0
        %480 = vmatpush1.msra.mxu0 0.0
        %481 = vmatprep.subr.mxu0 0.0
        %482 = vmatpush1.msra.mxu0 0.0
        %483 = vmatprep.subr.mxu0 0.0
        %484 = vmatpush1.msra.mxu0 0.0
        %485 = vmatprep.subr.mxu0 0.0
        %486 = vmatpush1.msra.mxu0 0.0
        %487 = vmatprep.subr.mxu0 0.0
        %488 = vmatpush1.msra.mxu0 0.0
        %489 = vmatprep.subr.mxu0 0.0
        %490 = vmatpush1.msra.mxu0 0.0
        %491 = vmatprep.subr.mxu0 0.0
        %492 = vmatpush1.msra.mxu0 0.0
        %493 = vmatprep.subr.mxu0 0.0
        %494 = vmatpush1.msra.mxu0 0.0
        %495 = vmatprep.subr.mxu0 0.0
        %496 = vmatpush1.msra.mxu0 0.0
        %497 = vmatprep.subr.mxu0 0.0
        %498 = vmatpush1.msra.mxu0 0.0
        %499 = vmatprep.subr.mxu0 0.0
        %500 = vmatpush1.msra.mxu0 0.0
        %501 = vmatprep.subr.mxu0 0.0
        %502 = vmatpush1.msra.mxu0 0.0
        %503 = vmatprep.subr.mxu0 0.0
        %504 = vmatpush1.msra.mxu0 0.0
        %505 = vmatprep.subr.mxu0 0.0
        %506 = vmatpush1.msra.mxu0 0.0
        %507 = vmatprep.subr.mxu0 0.0
        %508 = vmatpush1.msra.mxu0 0.0
        %509 = vmatprep.subr.mxu0 0.0
        %510 = vmatpush1.msra.mxu0 0.0
        %511 = vmatprep.subr.mxu0 0.0
        %512 = vmatpush1.msra.mxu0 0.0
        %513 = vmatprep.subr.mxu0 0.0
        %514 = vmatpush1.msra.mxu0 0.0
        %515 = vmatprep.subr.mxu0 0.0
        %516 = vmatpush1.msra.mxu0 0.0
        %517 = vmatprep.subr.mxu0 0.0
        %518 = vmatpush1.msra.mxu0 0.0
        %519 = vmatprep.subr.mxu0 0.0
        %520 = vmatpush1.msra.mxu0 0.0
        %521 = vmatprep.subr.mxu0 0.0
        %522 = vmatpush1.msra.mxu0 0.0
        %523 = vmatprep.subr.mxu0 0.0
        %524 = vmatpush1.msra.mxu0 0.0
        %525 = vmatprep.subr.mxu0 0.0
        %526 = vmatpush1.msra.mxu0 0.0
        %527 = vmatprep.subr.mxu0 0.0
        %528 = vmatpush1.msra.mxu0 0.0
        %529 = vmatprep.mubr.f32.mxu0 0.0
        %530 = vmatmul.mubr.f32.gmra.mrb[0].mxu0 %v414
        %v531 = vpop.f32.mrb[0].mxu0
        %v532 = vadd.f32 %v410, %v531
        %v533 = vpop.f32.mrb[0].mxu0
        %534 = vmatprep.mubr.f32.mxu0 0.0
        %535 = vmatmul.mubr.f32.gmra.mrb[0].mxu0 %v417
        %v536 = vpop.f32.mrb[0].mxu0
        %v537 = vadd.f32 %v410, %v536
        %v538 = vpop.f32.mrb[0].mxu0
        %539 = vmatprep.mubr.f32.mxu0 0.0
        %540 = vmatmul.mubr.f32.gmra.mrb[0].mxu0 %v420
        %v541 = vpop.f32.mrb[0].mxu0
        %v542 = vadd.f32 %v410, %v541
        %v543 = vpop.f32.mrb[0].mxu0
        %544 = vmatprep.mubr.f32.mxu0 0.0
        %545 = vmatmul.mubr.f32.gmra.mrb[0].mxu0 %v423
        %v546 = vpop.f32.mrb[0].mxu0
        %v547 = vadd.f32 %v410, %v546
        %v548 = vpop.f32.mrb[0].mxu0
        %549 = vmatprep.mubr.f32.mxu0 0.0
        %550 = vmatmul.mubr.f32.gmra.mrb[0].mxu0 %v426
        %v551 = vpop.f32.mrb[0].mxu0
        %v552 = vadd.f32 %v410, %v551
        %v553 = vpop.f32.mrb[0].mxu0
        %554 = vmatprep.mubr.f32.mxu0 0.0
        %555 = vmatmul.mubr.f32.gmra.mrb[0].mxu0 %v429
        %v556 = vpop.f32.mrb[0].mxu0
        %v557 = vadd.f32 %v410, %v556
        %v558 = vpop.f32.mrb[0].mxu0
        %559 = vmatprep.mubr.f32.mxu0 0.0
        %560 = vmatmul.mubr.f32.gmra.mrb[0].mxu0 %v432
        %v561 = vpop.f32.mrb[0].mxu0
        %v562 = vadd.f32 %v410, %v561
        %v563 = vpop.f32.mrb[0].mxu0
        %564 = vmatprep.mubr.f32.mxu0 0.0
        %565 = vmatmul.mubr.f32.gmra.mrb[0].mxu0 %v435
        %v566 = vpop.f32.mrb[0].mxu0
        %v567 = vadd.f32 %v410, %v566
        %v568 = vpop.f32.mrb[0].mxu0
        %569 = vmatprep.mubr.f32.mxu0 0.0
        %570 = vmatmul.mubr.f32.gmra.mrb[0].mxu0 %v438
        %v571 = vpop.f32.mrb[0].mxu0
        %v572 = vadd.f32 %v410, %v571
        %v573 = vpop.f32.mrb[0].mxu0
        %574 = vmatprep.mubr.f32.mxu0 0.0
        %575 = vmatmul.mubr.f32.gmra.mrb[0].mxu0 %v441
        %v576 = vpop.f32.mrb[0].mxu0
        %v577 = vadd.f32 %v410, %v576
        %v578 = vpop.f32.mrb[0].mxu0
        %579 = vmatprep.mubr.f32.mxu0 0.0
        %580 = vmatmul.mubr.f32.gmra.mrb[0].mxu0 %v444
        %v581 = vpop.f32.mrb[0].mxu0
        %v582 = vadd.f32 %v410, %v581
        %v583 = vpop.f32.mrb[0].mxu0
        %584 = vmatprep.mubr.f32.mxu0 0.0
        %585 = vmatmul.mubr.f32.gmra.mrb[0].mxu0 %v447
        %v586 = vpop.f32.mrb[0].mxu0
        %v587 = vadd.f32 %v410, %v586
        %v588 = vpop.f32.mrb[0].mxu0
        %589 = vmatprep.mubr.f32.mxu0 0.0
        %590 = vmatmul.mubr.f32.gmra.mrb[0].mxu0 %v450
        %v591 = vpop.f32.mrb[0].mxu0
        %v592 = vadd.f32 %v410, %v591
        %v593 = vpop.f32.mrb[0].mxu0
        %594 = vmatprep.mubr.f32.mxu0 0.0
        %595 = vmatmul.mubr.f32.gmra.mrb[0].mxu0 %v453
        %v596 = vpop.f32.mrb[0].mxu0
        %v597 = vadd.f32 %v410, %v596
        %v598 = vpop.f32.mrb[0].mxu0
        %599 = vmatprep.mubr.f32.mxu0 0.0
        %600 = vmatmul.mubr.f32.gmra.mrb[0].mxu0 %v456
        %v601 = vpop.f32.mrb[0].mxu0
        %v602 = vadd.f32 %v410, %v601
        %v603 = vpop.f32.mrb[0].mxu0
        %604 = vmatprep.mubr.f32.mxu0 0.0
        %605 = vmatmul.mubr.f32.gmra.mrb[0].mxu0 %v459
        %v606 = vpop.f32.mrb[0].mxu0
        %v607 = vadd.f32 %v410, %v606
        %v608 = vpop.f32.mrb[0].mxu0
        %609 = vdwg.mxu0
        %v610 = vmax.f32 %v532, 0.0
        %v611 = vmax.f32 %v537, 0.0
        %v612 = vmax.f32 %v542, 0.0
        %v613 = vmax.f32 %v547, 0.0
        %v614 = vmax.f32 %v552, 0.0
        %v615 = vmax.f32 %v557, 0.0
        %v616 = vmax.f32 %v562, 0.0
        %v617 = vmax.f32 %v567, 0.0
        %v618 = vmax.f32 %v572, 0.0
        %v619 = vmax.f32 %v577, 0.0
        %v620 = vmax.f32 %v582, 0.0
        %v621 = vmax.f32 %v587, 0.0
        %v622 = vmax.f32 %v592, 0.0
        %v623 = vmax.f32 %v597, 0.0
        %v624 = vmax.f32 %v602, 0.0
        %v625 = vmax.f32 %v607, 0.0
        %v626 = vld [vmem:[%s3] sm:$0xff]
        %v627 = vld [vmem:[%s3 + $0x8] sm:$0xff]
        %v628 = vld [vmem:[%s3 + $0x10] sm:$0xff]
        %v629 = vld [vmem:[%s3 + $0x18] sm:$0xff]
        %v630 = vld [vmem:[%s4] sm:$0x1]
        %v632 = vlaneseq
        %v633 = vshrl.u32 %v632, 7
        %v634 = vsub.s32 0, %v633
        %v635 = vrot.slane %v630, %v634
        %vm637 = vcmask 261120
        %v639 = vsel %vm637, %v610, 0
        %v642 = vsel %vm637, %v611, 0
        %v645 = vsel %vm637, %v612, 0
        %v648 = vsel %vm637, %v613, 0
        %v651 = vsel %vm637, %v614, 0
        %v654 = vsel %vm637, %v615, 0
        %v657 = vsel %vm637, %v616, 0
        %v660 = vsel %vm637, %v617, 0
        %v663 = vsel %vm637, %v618, 0
        %v666 = vsel %vm637, %v619, 0
        %v669 = vsel %vm637, %v620, 0
        %v672 = vsel %vm637, %v621, 0
        %v675 = vsel %vm637, %v622, 0
        %v678 = vsel %vm637, %v623, 0
        %v681 = vsel %vm637, %v624, 0
        %v684 = vsel %vm637, %v625, 0
        %686 = vmatprep.subr.mxu0 0.0
        %687 = vmatpush1.msra.mxu0 %v626
        %688 = vmatprep.subr.mxu0 0.0
        %689 = vmatpush1.msra.mxu0 %v627
        %690 = vmatprep.subr.mxu0 0.0
        %691 = vmatpush1.msra.mxu0 %v628
        %692 = vmatprep.subr.mxu0 0.0
        %693 = vmatpush1.msra.mxu0 %v629
        %694 = vmatprep.subr.mxu0 0.0
        %695 = vmatpush1.msra.mxu0 0.0
        %696 = vmatprep.subr.mxu0 0.0
        %697 = vmatpush1.msra.mxu0 0.0
        %698 = vmatprep.subr.mxu0 0.0
        %699 = vmatpush1.msra.mxu0 0.0
        %700 = vmatprep.subr.mxu0 0.0
        %701 = vmatpush1.msra.mxu0 0.0
        %702 = vmatprep.subr.mxu0 0.0
        %703 = vmatpush1.msra.mxu0 0.0
        %704 = vmatprep.subr.mxu0 0.0
        %705 = vmatpush1.msra.mxu0 0.0
        %706 = vmatprep.subr.mxu0 0.0
        %707 = vmatpush1.msra.mxu0 0.0
        %708 = vmatprep.subr.mxu0 0.0
        %709 = vmatpush1.msra.mxu0 0.0
        %710 = vmatprep.subr.mxu0 0.0
        %711 = vmatpush1.msra.mxu0 0.0
        %712 = vmatprep.subr.mxu0 0.0
        %713 = vmatpush1.msra.mxu0 0.0
        %714 = vmatprep.subr.mxu0 0.0
        %715 = vmatpush1.msra.mxu0 0.0
        %716 = vmatprep.subr.mxu0 0.0
        %717 = vmatpush1.msra.mxu0 0.0
        %718 = vmatprep.subr.mxu0 0.0
        %719 = vmatpush1.msra.mxu0 0.0
        %720 = vmatprep.subr.mxu0 0.0
        %721 = vmatpush1.msra.mxu0 0.0
        %722 = vmatprep.subr.mxu0 0.0
        %723 = vmatpush1.msra.mxu0 0.0
        %724 = vmatprep.subr.mxu0 0.0
        %725 = vmatpush1.msra.mxu0 0.0
        %726 = vmatprep.subr.mxu0 0.0
        %727 = vmatpush1.msra.mxu0 0.0
        %728 = vmatprep.subr.mxu0 0.0
        %729 = vmatpush1.msra.mxu0 0.0
        %730 = vmatprep.subr.mxu0 0.0
        %731 = vmatpush1.msra.mxu0 0.0
        %732 = vmatprep.subr.mxu0 0.0
        %733 = vmatpush1.msra.mxu0 0.0
        %734 = vmatprep.subr.mxu0 0.0
        %735 = vmatpush1.msra.mxu0 0.0
        %736 = vmatprep.subr.mxu0 0.0
        %737 = vmatpush1.msra.mxu0 0.0
        %738 = vmatprep.subr.mxu0 0.0
        %739 = vmatpush1.msra.mxu0 0.0
        %740 = vmatprep.subr.mxu0 0.0
        %741 = vmatpush1.msra.mxu0 0.0
        %742 = vmatprep.subr.mxu0 0.0
        %743 = vmatpush1.msra.mxu0 0.0
        %744 = vmatprep.subr.mxu0 0.0
        %745 = vmatpush1.msra.mxu0 0.0
        %746 = vmatprep.subr.mxu0 0.0
        %747 = vmatpush1.msra.mxu0 0.0
        %748 = vmatprep.subr.mxu0 0.0
        %749 = vmatpush1.msra.mxu0 0.0
        %750 = vmatprep.mubr.f32.mxu0 0.0
        %751 = vmatmul.mubr.f32.gmra.mrb[0].mxu0 %v639
        %v752 = vpop.f32.mrb[0].mxu0
        %v753 = vadd.f32 %v635, %v752
        %v754 = vpop.f32.mrb[0].mxu0
        %755 = vmatprep.mubr.f32.mxu0 0.0
        %756 = vmatmul.mubr.f32.gmra.mrb[0].mxu0 %v642
        %v757 = vpop.f32.mrb[0].mxu0
        %v758 = vadd.f32 %v635, %v757
        %v759 = vpop.f32.mrb[0].mxu0
        %760 = vmatprep.mubr.f32.mxu0 0.0
        %761 = vmatmul.mubr.f32.gmra.mrb[0].mxu0 %v645
        %v762 = vpop.f32.mrb[0].mxu0
        %v763 = vadd.f32 %v635, %v762
        %v764 = vpop.f32.mrb[0].mxu0
        %765 = vmatprep.mubr.f32.mxu0 0.0
        %766 = vmatmul.mubr.f32.gmra.mrb[0].mxu0 %v648
        %v767 = vpop.f32.mrb[0].mxu0
        %v768 = vadd.f32 %v635, %v767
        %v769 = vpop.f32.mrb[0].mxu0
        %770 = vmatprep.mubr.f32.mxu0 0.0
        %771 = vmatmul.mubr.f32.gmra.mrb[0].mxu0 %v651
        %v772 = vpop.f32.mrb[0].mxu0
        %v773 = vadd.f32 %v635, %v772
        %v774 = vpop.f32.mrb[0].mxu0
        %775 = vmatprep.mubr.f32.mxu0 0.0
        %776 = vmatmul.mubr.f32.gmra.mrb[0].mxu0 %v654
        %v777 = vpop.f32.mrb[0].mxu0
        %v778 = vadd.f32 %v635, %v777
        %v779 = vpop.f32.mrb[0].mxu0
        %780 = vmatprep.mubr.f32.mxu0 0.0
        %781 = vmatmul.mubr.f32.gmra.mrb[0].mxu0 %v657
        %v782 = vpop.f32.mrb[0].mxu0
        %v783 = vadd.f32 %v635, %v782
        %v784 = vpop.f32.mrb[0].mxu0
        %785 = vmatprep.mubr.f32.mxu0 0.0
        %786 = vmatmul.mubr.f32.gmra.mrb[0].mxu0 %v660
        %v787 = vpop.f32.mrb[0].mxu0
        %v788 = vadd.f32 %v635, %v787
        %v789 = vpop.f32.mrb[0].mxu0
        %790 = vmatprep.mubr.f32.mxu0 0.0
        %791 = vmatmul.mubr.f32.gmra.mrb[0].mxu0 %v663
        %v792 = vpop.f32.mrb[0].mxu0
        %v793 = vadd.f32 %v635, %v792
        %v794 = vpop.f32.mrb[0].mxu0
        %795 = vmatprep.mubr.f32.mxu0 0.0
        %796 = vmatmul.mubr.f32.gmra.mrb[0].mxu0 %v666
        %v797 = vpop.f32.mrb[0].mxu0
        %v798 = vadd.f32 %v635, %v797
        %v799 = vpop.f32.mrb[0].mxu0
        %800 = vmatprep.mubr.f32.mxu0 0.0
        %801 = vmatmul.mubr.f32.gmra.mrb[0].mxu0 %v669
        %v802 = vpop.f32.mrb[0].mxu0
        %v803 = vadd.f32 %v635, %v802
        %v804 = vpop.f32.mrb[0].mxu0
        %805 = vmatprep.mubr.f32.mxu0 0.0
        %806 = vmatmul.mubr.f32.gmra.mrb[0].mxu0 %v672
        %v807 = vpop.f32.mrb[0].mxu0
        %v808 = vadd.f32 %v635, %v807
        %v809 = vpop.f32.mrb[0].mxu0
        %810 = vmatprep.mubr.f32.mxu0 0.0
        %811 = vmatmul.mubr.f32.gmra.mrb[0].mxu0 %v675
        %v812 = vpop.f32.mrb[0].mxu0
        %v813 = vadd.f32 %v635, %v812
        %v814 = vpop.f32.mrb[0].mxu0
        %815 = vmatprep.mubr.f32.mxu0 0.0
        %816 = vmatmul.mubr.f32.gmra.mrb[0].mxu0 %v678
        %v817 = vpop.f32.mrb[0].mxu0
        %v818 = vadd.f32 %v635, %v817
        %v819 = vpop.f32.mrb[0].mxu0
        %820 = vmatprep.mubr.f32.mxu0 0.0
        %821 = vmatmul.mubr.f32.gmra.mrb[0].mxu0 %v681
        %v822 = vpop.f32.mrb[0].mxu0
        %v823 = vadd.f32 %v635, %v822
        %v824 = vpop.f32.mrb[0].mxu0
        %825 = vmatprep.mubr.f32.mxu0 0.0
        %826 = vmatmul.mubr.f32.gmra.mrb[0].mxu0 %v684
        %v827 = vpop.f32.mrb[0].mxu0
        %v828 = vadd.f32 %v635, %v827
        %v829 = vpop.f32.mrb[0].mxu0
        %830 = vdwg.mxu0
        %v831 = vmax.f32 %v753, 0.0
        %v832 = vmax.f32 %v758, 0.0
        %v833 = vmax.f32 %v763, 0.0
        %v834 = vmax.f32 %v768, 0.0
        %v835 = vmax.f32 %v773, 0.0
        %v836 = vmax.f32 %v778, 0.0
        %v837 = vmax.f32 %v783, 0.0
        %v838 = vmax.f32 %v788, 0.0
        %v839 = vmax.f32 %v793, 0.0
        %v840 = vmax.f32 %v798, 0.0
        %v841 = vmax.f32 %v803, 0.0
        %v842 = vmax.f32 %v808, 0.0
        %v843 = vmax.f32 %v813, 0.0
        %v844 = vmax.f32 %v818, 0.0
        %v845 = vmax.f32 %v823, 0.0
        %v846 = vmax.f32 %v828, 0.0
        %v847 = vsel %vm637, %v831, 0.0
        %v848 = vsel %vm637, %v832, 0.0
        %v849 = vadd.f32 %v847, %v848
        %v850 = vsel %vm637, %v833, 0.0
        %v851 = vadd.f32 %v849, %v850
        %v852 = vsel %vm637, %v834, 0.0
        %v853 = vadd.f32 %v851, %v852
        %v854 = vsel %vm637, %v835, 0.0
        %v855 = vadd.f32 %v853, %v854
        %v856 = vsel %vm637, %v836, 0.0
        %v857 = vadd.f32 %v855, %v856
        %v858 = vsel %vm637, %v837, 0.0
        %v859 = vadd.f32 %v857, %v858
        %v860 = vsel %vm637, %v838, 0.0
        %v861 = vadd.f32 %v859, %v860
        %v862 = vrot.slane %v861, 4
        %v863 = vadd.f32 %v861, %v862
        %v864 = vrot.slane %v863, 2
        %v865 = vadd.f32 %v863, %v864
        %v866 = vrot.slane %v865, 1
        %v867 = vadd.f32 %v865, %v866
        %v868 = vsel %vm637, %v839, 0.0
        %v869 = vsel %vm637, %v840, 0.0
        %v870 = vadd.f32 %v868, %v869
        %v871 = vsel %vm637, %v841, 0.0
        %v872 = vadd.f32 %v870, %v871
        %v873 = vsel %vm637, %v842, 0.0
        %v874 = vadd.f32 %v872, %v873
        %v875 = vsel %vm637, %v843, 0.0
        %v876 = vadd.f32 %v874, %v875
        %v877 = vsel %vm637, %v844, 0.0
        %v878 = vadd.f32 %v876, %v877
        %v879 = vsel %vm637, %v845, 0.0
        %v880 = vadd.f32 %v878, %v879
        %v881 = vsel %vm637, %v846, 0.0
        %v882 = vadd.f32 %v880, %v881
        %v883 = vrot.slane %v882, 4
        %v884 = vadd.f32 %v882, %v883
        %v885 = vrot.slane %v884, 2
        %v886 = vadd.f32 %v884, %v885
        %v887 = vrot.slane %v886, 1
        %v888 = vadd.f32 %v886, %v887
        %p889 = scmp.eq.s32.totalorder %s20, 0
        // Predicated region
        $region91: #{tpu_custom_call.1} parent=85 // pred_check
          %p890 = pneg %p889
        $region92: #{tpu_custom_call.1} parent=85 // pred_check_branch
          %892 = sbr.rel (%p890) target = $region94
        $region93: #{tpu_custom_call.1} parent=85 // pred_region
          %vm895 = vcmask 1041409
          %v896 = vsel %vm895, %v888, %v867
          %vm898 = vcmask 254976
          %899 = vst.msk [vmem:[#allocation2] sm:$0x3] %vm898, %v896
        $region94: #{tpu_custom_call.1} parent=85 // pred_fallthru
          _
        %p900 = scmp.gt.s32.totalorder %s20, 0
        // Predicated region
        $region95: #{tpu_custom_call.1} parent=85 // pred_check
          %p901 = pneg %p900
        $region96: #{tpu_custom_call.1} parent=85 // pred_check_branch
          %903 = sbr.rel (%p901) target = $region98
        $region97: #{tpu_custom_call.1} parent=85 // pred_region
          %v904 = vld [vmem:[#allocation2] sm:$0x3]
          %vm907 = vcmask 1041409
          %v908 = vsel %vm907, %v888, %v867
          %v910 = vadd.f32 %v904, %v908
          %vm911 = vcmask 254976
          %912 = vst.msk [vmem:[#allocation2] sm:$0x3] %vm911, %v910
        $region98: #{tpu_custom_call.1} parent=85 // pred_fallthru
          _
        %p913 = scmp.eq.s32.totalorder %s20, 3
        // Predicated region
        $region99: #{tpu_custom_call.1} parent=85 // pred_check
          %p914 = pneg %p913
        $region100: #{tpu_custom_call.1} parent=85 // pred_check_branch
          %916 = sbr.rel (%p914) target = $region102
        $region101: #{tpu_custom_call.1} parent=85 // pred_region
          %v917 = vld [vmem:[#allocation2] sm:$0x3]
          %v918 = vmul.f32 %v917, 0.00390625
          %v919 = vld [vmem:[%s5] sm:$0x1]
          %v921 = vlaneseq
          %v922 = vshrl.u32 %v921, 7
          %v923 = vsub.s32 0, %v922
          %v924 = vrot.slane %v919, %v923
          %v926 = vmul.f32 %v918, %v924
          %s927 = scalar_lea.vmem %s5, 1
          %v928 = vld [vmem:[%s927] sm:$0x1]
          %v930 = vlaneseq
          %v931 = vshrl.u32 %v930, 7
          %v932 = vsub.s32 0, %v931
          %v933 = vrot.slane %v928, %v932
          %v935 = vmul.f32 %v918, %v933
          %v937 = vrot.slane %v935, 6
          %vm939 = vcmask 1041408
          %v940 = vsel %vm939, %v926, %v937
          %v941 = vld [vmem:[%s6] sm:$0xff]
          %v942 = vld [vmem:[%s6 + $0x8] sm:$0xff]
          %v943 = vld [vmem:[%s6 + $0x10] sm:$0xff]
          %v944 = vld [vmem:[%s6 + $0x18] sm:$0xff]
          %v945 = vld [vmem:[%s7] sm:$0x1]
          %v947 = vlaneseq
          %v948 = vshrl.u32 %v947, 7
          %v949 = vsub.s32 0, %v948
          %v950 = vrot.slane %v945, %v949
          %v953 = vsel %vm637, %v940, 0
          %955 = vmatprep.subr.mxu0 0.0
          %956 = vmatpush1.msra.mxu0 %v941
          %957 = vmatprep.subr.mxu0 0.0
          %958 = vmatpush1.msra.mxu0 %v942
          %959 = vmatprep.subr.mxu0 0.0
          %960 = vmatpush1.msra.mxu0 %v943
          %961 = vmatprep.subr.mxu0 0.0
          %962 = vmatpush1.msra.mxu0 %v944
          %963 = vmatprep.subr.mxu0 0.0
          %964 = vmatpush1.msra.mxu0 0.0
          %965 = vmatprep.subr.mxu0 0.0
          %966 = vmatpush1.msra.mxu0 0.0
          %967 = vmatprep.subr.mxu0 0.0
          %968 = vmatpush1.msra.mxu0 0.0
          %969 = vmatprep.subr.mxu0 0.0
          %970 = vmatpush1.msra.mxu0 0.0
          %971 = vmatprep.subr.mxu0 0.0
          %972 = vmatpush1.msra.mxu0 0.0
          %973 = vmatprep.subr.mxu0 0.0
          %974 = vmatpush1.msra.mxu0 0.0
          %975 = vmatprep.subr.mxu0 0.0
          %976 = vmatpush1.msra.mxu0 0.0
          %977 = vmatprep.subr.mxu0 0.0
          %978 = vmatpush1.msra.mxu0 0.0
          %979 = vmatprep.subr.mxu0 0.0
          %980 = vmatpush1.msra.mxu0 0.0
          %981 = vmatprep.subr.mxu0 0.0
          %982 = vmatpush1.msra.mxu0 0.0
          %983 = vmatprep.subr.mxu0 0.0
          %984 = vmatpush1.msra.mxu0 0.0
          %985 = vmatprep.subr.mxu0 0.0
          %986 = vmatpush1.msra.mxu0 0.0
          %987 = vmatprep.subr.mxu0 0.0
          %988 = vmatpush1.msra.mxu0 0.0
          %989 = vmatprep.subr.mxu0 0.0
          %990 = vmatpush1.msra.mxu0 0.0
          %991 = vmatprep.subr.mxu0 0.0
          %992 = vmatpush1.msra.mxu0 0.0
          %993 = vmatprep.subr.mxu0 0.0
          %994 = vmatpush1.msra.mxu0 0.0
          %995 = vmatprep.subr.mxu0 0.0
          %996 = vmatpush1.msra.mxu0 0.0
          %997 = vmatprep.subr.mxu0 0.0
          %998 = vmatpush1.msra.mxu0 0.0
          %999 = vmatprep.subr.mxu0 0.0
          %1000 = vmatpush1.msra.mxu0 0.0
          %1001 = vmatprep.subr.mxu0 0.0
          %1002 = vmatpush1.msra.mxu0 0.0
          %1003 = vmatprep.subr.mxu0 0.0
          %1004 = vmatpush1.msra.mxu0 0.0
          %1005 = vmatprep.subr.mxu0 0.0
          %1006 = vmatpush1.msra.mxu0 0.0
          %1007 = vmatprep.subr.mxu0 0.0
          %1008 = vmatpush1.msra.mxu0 0.0
          %1009 = vmatprep.subr.mxu0 0.0
          %1010 = vmatpush1.msra.mxu0 0.0
          %1011 = vmatprep.subr.mxu0 0.0
          %1012 = vmatpush1.msra.mxu0 0.0
          %1013 = vmatprep.subr.mxu0 0.0
          %1014 = vmatpush1.msra.mxu0 0.0
          %1015 = vmatprep.subr.mxu0 0.0
          %1016 = vmatpush1.msra.mxu0 0.0
          %1017 = vmatprep.subr.mxu0 0.0
          %1018 = vmatpush1.msra.mxu0 0.0
          %1019 = vmatprep.mubr.f32.mxu0 0.0
          %1020 = vmatmul.mubr.f32.gmra.mrb[0].mxu0 %v953
          %v1021 = vpop.f32.mrb[0].mxu0
          %v1022 = vadd.f32 %v950, %v1021
          %v1023 = vpop.f32.mrb[0].mxu0
          %1024 = vdwg.mxu0
          %v1025 = vmax.f32 %v1022, 0.0
          %v1026 = vand.u32 2147483647, %v1022
          %v1027 = vsub.f32 0.0, %v1026
          %v1028 = vmul.f32 %v1027, 1.442695
          %v1029 = vpow.pop %v1028
          %v1030 = vadd.f32 %v1029, 1.0
          %v1031 = vlog2.pop %v1030
          %v1032 = vmul.f32 %v1031, 0.6931472
          %v1033 = vmul.f32 -0.5, %v1029
          %v1034 = vadd.f32 %v1033, 1.0
          %v1035 = vmul.f32 %v1034, %v1029
          %v1036 = vand.u32 2147483647, %v1029
          %vm1037 = vcmp.lt.f32.partialorder %v1036, 0.0004427343
          %v1038 = vsel %vm1037, %v1035, %v1032
          %v1039 = vadd.f32 %v1025, %v1038
          %v1040 = vadd.f32 %v1022, 0.0
          %v1042 = vrot.slane %v1022, 2
          %v1044 = vadd.f32 %v1040, %v1042
          %v1045 = vmul.f32 %v1044, 0.5
          %v1046 = vadd.f32 %v1039, 0.0
          %v1048 = vrot.slane %v1039, 2
          %v1050 = vadd.f32 %v1046, %v1048
          %v1051 = vmul.f32 %v1050, 0.5
          %v1052 = vsub.f32 %v1022, %v1045
          %v1053 = vmul.f32 %v1052, %v1052
          %v1054 = vadd.f32 %v1053, 0.0
          %v1056 = vrot.slane %v1045, 6
          %v1058 = vsub.f32 %v1022, %v1056
          %v1059 = vmul.f32 %v1058, %v1058
          %v1061 = vrot.slane %v1059, 2
          %v1063 = vadd.f32 %v1054, %v1061
          %v1064 = vsub.f32 %v1039, %v1051
          %v1065 = vmul.f32 %v1064, %v1064
          %v1066 = vadd.f32 %v1065, 0.0
          %v1068 = vrot.slane %v1051, 6
          %v1070 = vsub.f32 %v1039, %v1068
          %v1071 = vmul.f32 %v1070, %v1070
          %v1073 = vrot.slane %v1071, 2
          %v1075 = vadd.f32 %v1066, %v1073
          %1077 = vrot.lane.b32.xlu0 %v1063, 64
          %v1078 = vpop.permute.xlu0 %1077
          %1081 = vrot.lane.b32.xlu0 %v1075, 64
          %v1082 = vpop.permute.xlu0 %1081
          %v1084 = vsel %vm637, %v1045, %v1051
          %vm1085 = vcmask 523264
          %v1086 = vsel %vm1085, %v1084, %v1078
          %vm1087 = vcmask 785408
          %v1088 = vsel %vm1087, %v1086, %v1082
          %1089 = vst [vmem:[#allocation4] sm:$0x3] %v1088
        $region102: #{tpu_custom_call.1} parent=85 // pred_fallthru
          _
        // Predicated region
        $region103: #{tpu_custom_call.1} parent=85 // pred_check
          %p1090 = pneg %p206
        $region104: #{tpu_custom_call.1} parent=85 // pred_check_branch
          %1092 = sbr.rel (%p1090) target = $region106
        $region105: #{tpu_custom_call.1} parent=85 // pred_region
          %s1094 = ssub.s32 32, 32
          %1095 = vsyncadd [#allocation5], %s1094
          %s1097 = sshll.u32 [#allocation4], 4
          %s1098 = int_to_ptr.vmem [resolvable:$true] %s1097
          %1100 = dma.vmem_to_hbm [thread:$0]  %s1098, 32, %s8, [#allocation5]
        $region106: #{tpu_custom_call.1} parent=85 // pred_fallthru
          _
        // Predicated region
        $region107: #{tpu_custom_call.1} parent=85 // pred_check
          %p1101 = pneg %p206
        $region108: #{tpu_custom_call.1} parent=85 // pred_check_branch
          %1103 = sbr.rel (%p1101) target = $region110
        $region109: #{tpu_custom_call.1} parent=85 // pred_region
          %1104 = dma.done [#allocation5], 32
        $region110: #{tpu_custom_call.1} parent=85 // pred_fallthru
          _
      $region86: #{tpu_custom_call.1} parent=5 // pred_fallthru
        _
      %p1105 = scmp.le.s32.totalorder 2, %s15
      // Predicated region
      $region111: #{tpu_custom_call.1} parent=5 // pred_check
        %p1106 = pneg %p1105
      $region112: #{tpu_custom_call.1} parent=5 // pred_check_branch
        %1108 = sbr.rel (%p1106) target = $region114
      $region113: #{tpu_custom_call.1} parent=5 // pred_region
        %s1109 = ssub.s32 %s15, 2
      $region114: #{tpu_custom_call.1} parent=5 // pred_fallthru
        _
    $region6: #{tpu_custom_call.1} parent=1 // loop_footer
      %s19 = sadd.s32 1, %s15
    $region7: #{tpu_custom_call.1} parent=1 // loop_footer_branch
      %14 = sbr.rel target = $region3
    $region8: #{tpu_custom_call.1} parent=1 // loop_exit
      _
    %1110 = vsyncpa [#allocation5], 1
    %s1111 = scalar_lea.sflag [#allocation5], 1
    %1112 = vsyncpa %s1111, 1

</llo_original>
